<compile_context>
chip_gen: v6e
topology: v6e:2x2x1
jax: 0.10.0
libtpu: 0.0.40
codegen_flags: <defaults>
</compile_context>

<pallas_src>
import math
import functools

import jax
import jax.numpy as jnp
from jax.experimental import pallas as pl
from jax.experimental.pallas import tpu as pltpu


def _sdpa_kernel(q_ref, k_ref, v_ref, o_ref, attn_ref=None, *,
                 inv_scale: float, use_bf16: bool, valid_len: int, key_len: int):
    # q_ref: (1, TQ, D)   k_ref/v_ref: (1, KEY_LEN, D)
    # o_ref: (1, TQ, D)   attn_ref: (1, TQ, KEY_LEN) or absent
    q = q_ref[0]                                   # (TQ, D)
    k = k_ref[0]                                   # (KEY_LEN, D)
    v = v_ref[0]                                   # (KEY_LEN, D)

    if inv_scale != 1.0:
        q = q * inv_scale                          # fold 1/sqrt(d) into the small q tile

    if use_bf16:
        q = q.astype(jnp.bfloat16)
        k = k.astype(jnp.bfloat16)
        v = v.astype(jnp.bfloat16)

    # scores[i, t] = sum_d q[i, d] * k[t, d]  -- contraction on last dims, no k.T (XLU-free)
    s = jax.lax.dot_general(q, k, dimension_numbers=(((1,), (1,)), ((), ())),
                            preferred_element_type=jnp.float32)     # (TQ, KEY_LEN)

    if valid_len < key_len:                        # mask padded key columns (static check)
        col = jax.lax.broadcasted_iota(jnp.int32, s.shape, 1)
        s = jnp.where(col < valid_len, s, -1e9)

    # TODO(synk): optional boolean `mask` (masked_fill with -1e9) not implemented — mask=None path.
    m = jnp.max(s, axis=-1, keepdims=True)
    p = jnp.exp(s - m)                             # unnormalized probabilities
    l = jnp.sum(p, axis=-1, keepdims=True)
    inv_l = pl.reciprocal(l, approx=True)          # EUP slot, essentially free

    # TODO(synk): nn.Dropout on attn not implemented — dropout=None / inference path.
    p_mm = p.astype(jnp.bfloat16) if use_bf16 else p
    o = jax.lax.dot_general(p_mm, v, dimension_numbers=(((1,), (0,)), ((), ())),
                            preferred_element_type=jnp.float32)     # (TQ, D)

    if attn_ref is not None:
        attn_ref[0] = (p * inv_l).astype(attn_ref.dtype)
    o_ref[0] = (o * inv_l).astype(o_ref.dtype)     # normalize after the matmul


def _round_up(x: int, m: int) -> int:
    return ((x + m - 1) // m) * m


def _vmem_capacity_bytes() -> int:
    try:
        return int(pltpu.get_tpu_info().vmem_capacity_bytes)
    except Exception:
        return 64 << 20   # conservative default: v7x per-TensorCore VMEM


def _per_step_vmem_bytes(tq: int, key_len: int, D: int, return_attn: bool) -> int:
    f32 = 4
    qo = 2 * (2 * tq * D * f32)                    # q + o blocks, double-buffered
    kv = 2 * (key_len * D * f32)                   # k + v blocks, single-buffered
    attn = (2 * tq * key_len * f32) if return_attn else 0
    tmp = 3 * tq * key_len * f32                   # s / p / normalized-p f32 temporaries
    return qo + kv + attn + tmp


def _choose_tiling(T: int, D: int, return_attn: bool):
    """Returns (key_len, tq): padded key length and query-row tile (generation aware)."""
    budget = int(_vmem_capacity_bytes() * 0.8)
    if T <= 512:
        for tq in (256, 128):
            if T % tq == 0 and _per_step_vmem_bytes(tq, T, D, return_attn) <= budget:
                return T, tq
        return T, T                                # small/irregular T: whole-T block (legal: == full dims)
    key_len = T if T % 128 == 0 else _round_up(T, 128)
    for tq in (256, 128):
        if key_len % tq == 0 and _per_step_vmem_bytes(tq, key_len, D, return_attn) <= budget:
            return key_len, tq
    # TODO(synk): beyond ~8-16K tokens (esp. v7x) restructure as flash attention
    # (key-tile grid axis + online-softmax scratch) when attn is not required.
    return key_len, 128


def scaled_dot_product_attention(q: jnp.ndarray, k: jnp.ndarray, v: jnp.ndarray,
                                 *, scale: bool = True, return_attn: bool = True,
                                 use_bf16_matmul: bool = False):
    """q, k, v: [B, T, D].  Returns (output [B,T,D], attn [B,T,T]) or just output."""
    B, T, D = q.shape
    assert k.shape == (B, T, D) and v.shape == (B, T, D)
    inv_scale = (1.0 / math.sqrt(float(D))) if scale else 1.0

    key_len, tq = _choose_tiling(T, D, return_attn)
    if key_len != T:
        pad_cfg = ((0, 0), (0, key_len - T), (0, 0))
        q = jnp.pad(q, pad_cfg)
        k = jnp.pad(k, pad_cfg)
        v = jnp.pad(v, pad_cfg)
    grid = (B, key_len // tq)

    kernel = functools.partial(_sdpa_kernel, inv_scale=inv_scale,
                               use_bf16=use_bf16_matmul, valid_len=T, key_len=key_len)

    out_shape = [jax.ShapeDtypeStruct((B, key_len, D), q.dtype)]
    out_specs = [pl.BlockSpec((1, tq, D), lambda b, i: (b, i, 0))]
    if return_attn:
        out_shape.append(jax.ShapeDtypeStruct((B, key_len, key_len), q.dtype))
        out_specs.append(pl.BlockSpec((1, tq, key_len), lambda b, i: (b, i, 0)))

    vmem_limit = max(
        min(int(1.25 * _per_step_vmem_bytes(tq, key_len, D, return_attn)),
            int(_vmem_capacity_bytes() * 0.9)),
        32 << 20)

    def run(single_buffer_kv: bool):
        kv_kwargs = {"pipeline_mode": pl.Buffered(1)} if single_buffer_kv else {}
        # K/V block index is constant along the inner grid axis -> resident per batch.
        kv_spec = pl.BlockSpec((1, key_len, D), lambda b, i: (b, 0, 0), **kv_kwargs)
        call = pl.pallas_call(
            kernel,
            out_shape=tuple(out_shape),
            grid_spec=pltpu.PrefetchScalarGridSpec(
                num_scalar_prefetch=0,
                grid=grid,
                in_specs=[
                    pl.BlockSpec((1, tq, D), lambda b, i: (b, i, 0)),  # q: one query-row tile
                    kv_spec,                                           # k
                    kv_spec,                                           # v
                ],
                out_specs=tuple(out_specs),
            ),
            compiler_params=pltpu.CompilerParams(
                dimension_semantics=("parallel", "parallel"),
                vmem_limit_bytes=vmem_limit,
            ),
        )
        return call(q, k, v)

    try:
        results = run(single_buffer_kv=True)
    except Exception:
        # Older jax without BlockSpec(pipeline_mode=...): rebuild with default buffering.
        results = run(single_buffer_kv=False)

    if return_attn:
        out, attn = results
        if key_len != T:
            out, attn = out[:, :T, :], attn[:, :T, :T]
        return out, attn
    out = results[0] if isinstance(results, (tuple, list)) else results
    if key_len != T:
        out = out[:, :T, :]
    return out


if __name__ == "__main__":
    # Small deterministic example consistent with the module: B=2, T=8, D=32.
    B, T, D = 2, 8, 32
    key = jax.random.PRNGKey(0)
    kq, kk, kv = jax.random.split(key, 3)
    q = jax.random.normal(kq, (B, T, D), dtype=jnp.float32)
    k = jax.random.normal(kk, (B, T, D), dtype=jnp.float32)
    v = jax.random.normal(kv, (B, T, D), dtype=jnp.float32)

    out, attn = scaled_dot_product_attention(q, k, v, scale=True)
    out, attn = jax.block_until_ready((out, attn))

    # Pure-JAX reference (same math as the PyTorch forward).
    s_ref = jnp.einsum("btd,bsd->bts", q, k) / jnp.sqrt(jnp.float32(D))
    attn_ref = jax.nn.softmax(s_ref, axis=-1)
    out_ref = jnp.einsum("bts,bsd->btd", attn_ref, v)

    assert out.shape == (B, T, D) and attn.shape == (B, T, T)
    # Tolerance accounts for the EUP approximate reciprocal used in normalization.
    assert jnp.allclose(attn, attn_ref, atol=5e-3, rtol=5e-3), "attn mismatch vs reference"
    assert jnp.allclose(out, out_ref, atol=5e-3, rtol=5e-3), "output mismatch vs reference"

    # bf16-MXU path (looser tolerance) and the attn-free (output-only) path.
    out_bf16, _ = scaled_dot_product_attention(q, k, v, scale=True, use_bf16_matmul=True)
    out_bf16 = jax.block_until_ready(out_bf16)
    assert jnp.allclose(out_bf16, out_ref, atol=1e-1, rtol=1e-1), "bf16 output mismatch"

    out_only = scaled_dot_product_attention(q, k, v, scale=True, return_attn=False)
    out_only = jax.block_until_ready(out_only)
    assert jnp.allclose(out_only, out_ref, atol=5e-3, rtol=5e-3), "attn-free output mismatch"

    print("KERNEL_OK")
</pallas_src>

<mosaic_0001>
module attributes {stable_mosaic.version = 11 : i64} {
  func.func @_sdpa_kernel(%arg0: i32, %arg1: i32, %arg2: memref<1x8x32xf32, #tpu.memory_space<vmem>>, %arg3: memref<1x8x32xf32, #tpu.memory_space<vmem>>, %arg4: memref<1x8x32xf32, #tpu.memory_space<vmem>>, %arg5: memref<1x8x32xf32, #tpu.memory_space<vmem>>, %arg6: memref<1x8x8xf32, #tpu.memory_space<vmem>>) attributes {dimension_semantics = [#tpu.dimension_semantics<parallel>, #tpu.dimension_semantics<parallel>], iteration_bounds = array<i64: 2, 1>, scalar_prefetch = 0 : i64, scratch_operands = 0 : i64, tpu.core_type = #tpu.core_type<tc>, window_params = [{transform_indices = @transform_0, window_bounds = array<i64: 1, 8, 32>}, {pipeline_mode = #tpu.pipeline_mode<synchronous>, transform_indices = @transform_1, window_bounds = array<i64: 1, 8, 32>}, {pipeline_mode = #tpu.pipeline_mode<synchronous>, transform_indices = @transform_2, window_bounds = array<i64: 1, 8, 32>}, {transform_indices = @transform_3, window_bounds = array<i64: 1, 8, 32>}, {transform_indices = @transform_4, window_bounds = array<i64: 1, 8, 8>}]} {
    %c0 = arith.constant 0 : index
    %c0_0 = arith.constant 0 : index
    %c0_1 = arith.constant 0 : index
    %0 = vector.load %arg2[%c0, %c0_0, %c0_1] : memref<1x8x32xf32, #tpu.memory_space<vmem>>, vector<1x8x32xf32>
    %1 = vector.shape_cast %0 : vector<1x8x32xf32> to vector<8x32xf32>
    %c0_2 = arith.constant 0 : index
    %c0_3 = arith.constant 0 : index
    %c0_4 = arith.constant 0 : index
    %2 = vector.load %arg3[%c0_2, %c0_3, %c0_4] : memref<1x8x32xf32, #tpu.memory_space<vmem>>, vector<1x8x32xf32>
    %3 = vector.shape_cast %2 : vector<1x8x32xf32> to vector<8x32xf32>
    %c0_5 = arith.constant 0 : index
    %c0_6 = arith.constant 0 : index
    %c0_7 = arith.constant 0 : index
    %4 = vector.load %arg4[%c0_5, %c0_6, %c0_7] : memref<1x8x32xf32, #tpu.memory_space<vmem>>, vector<1x8x32xf32>
    %5 = vector.shape_cast %4 : vector<1x8x32xf32> to vector<8x32xf32>
    %cst = arith.constant 0.176776692 : f32
    %6 = vector.broadcast %cst : f32 to vector<8x32xf32>
    %7 = arith.mulf %1, %6 : vector<8x32xf32>
    %cst_8 = arith.constant dense<0.000000e+00> : vector<8x8xf32>
    %8 = tpu.matmul %7, %3, %cst_8 {dimension_numbers = #tpu.dot_dimension_numbers<[1], [1], [0], [0], [0, 0, 1, 0], [], []>} : vector<8x32xf32>, vector<8x32xf32>, vector<8x8xf32> -> vector<8x8xf32>
    %cst_9 = arith.constant dense<0xFF800000> : vector<8xf32>
    %9 = vector.multi_reduction <maximumf>, %8, %cst_9 [1] : vector<8x8xf32> to vector<8xf32>
    %10 = vector.shape_cast %9 : vector<8xf32> to vector<8x1xf32>
    %11 = vector.broadcast %10 : vector<8x1xf32> to vector<8x8xf32>
    %12 = arith.subf %8, %11 : vector<8x8xf32>
    %13 = math.exp %12 : vector<8x8xf32>
    %cst_10 = arith.constant dense<0.000000e+00> : vector<8xf32>
    %14 = vector.multi_reduction <add>, %13, %cst_10 [1] : vector<8x8xf32> to vector<8xf32>
    %15 = vector.shape_cast %14 : vector<8xf32> to vector<8x1xf32>
    %16 = tpu.reciprocal %15 {approx = true} : vector<8x1xf32> -> vector<8x1xf32>
    %cst_11 = arith.constant dense<0.000000e+00> : vector<8x32xf32>
    %17 = tpu.matmul %13, %5, %cst_11 {dimension_numbers = #tpu.dot_dimension_numbers<[1], [0], [0], [1], [0, 0, 1, 1], [], []>} : vector<8x8xf32>, vector<8x32xf32>, vector<8x32xf32> -> vector<8x32xf32>
    %18 = vector.broadcast %16 : vector<8x1xf32> to vector<8x8xf32>
    %19 = arith.mulf %13, %18 : vector<8x8xf32>
    %c0_12 = arith.constant 0 : index
    %c0_13 = arith.constant 0 : index
    %c0_14 = arith.constant 0 : index
    %20 = vector.load %arg6[%c0_12, %c0_13, %c0_14] : memref<1x8x8xf32, #tpu.memory_space<vmem>>, vector<1x8x8xf32>
    %21 = vector.shape_cast %20 : vector<1x8x8xf32> to vector<8x8xf32>
    %22 = vector.shape_cast %19 : vector<8x8xf32> to vector<1x8x8xf32>
    tpu.vector_store %arg6[%c0_12, %c0_13, %c0_14], %22 {strides = array<i32>} : memref<1x8x8xf32, #tpu.memory_space<vmem>>, vector<1x8x8xf32>,
    %23 = vector.broadcast %16 : vector<8x1xf32> to vector<8x32xf32>
    %24 = arith.mulf %17, %23 : vector<8x32xf32>
    %c0_15 = arith.constant 0 : index
    %c0_16 = arith.constant 0 : index
    %c0_17 = arith.constant 0 : index
    %25 = vector.load %arg5[%c0_15, %c0_16, %c0_17] : memref<1x8x32xf32, #tpu.memory_space<vmem>>, vector<1x8x32xf32>
    %26 = vector.shape_cast %25 : vector<1x8x32xf32> to vector<8x32xf32>
    %27 = vector.shape_cast %24 : vector<8x32xf32> to vector<1x8x32xf32>
    tpu.vector_store %arg5[%c0_15, %c0_16, %c0_17], %27 {strides = array<i32>} : memref<1x8x32xf32, #tpu.memory_space<vmem>>, vector<1x8x32xf32>,
    return
  }
  func.func @transform_0(%arg0: i32, %arg1: i32) -> (i32, i32, i32) {
    %c0_i32 = arith.constant 0 : i32
    %c0_i32_0 = arith.constant 0 : i32
    return %arg0, %arg1, %c0_i32 : i32, i32, i32
  }
  func.func @transform_1(%arg0: i32, %arg1: i32) -> (i32, i32, i32) {
    %c0_i32 = arith.constant 0 : i32
    %c0_i32_0 = arith.constant 0 : i32
    %c0_i32_1 = arith.constant 0 : i32
    return %arg0, %c0_i32, %c0_i32_0 : i32, i32, i32
  }
  func.func @transform_2(%arg0: i32, %arg1: i32) -> (i32, i32, i32) {
    %c0_i32 = arith.constant 0 : i32
    %c0_i32_0 = arith.constant 0 : i32
    %c0_i32_1 = arith.constant 0 : i32
    return %arg0, %c0_i32, %c0_i32_0 : i32, i32, i32
  }
  func.func @transform_3(%arg0: i32, %arg1: i32) -> (i32, i32, i32) {
    %c0_i32 = arith.constant 0 : i32
    %c0_i32_0 = arith.constant 0 : i32
    return %arg0, %arg1, %c0_i32 : i32, i32, i32
  }
  func.func @transform_4(%arg0: i32, %arg1: i32) -> (i32, i32, i32) {
    %c0_i32 = arith.constant 0 : i32
    %c0_i32_0 = arith.constant 0 : i32
    return %arg0, %arg1, %c0_i32 : i32, i32, i32
  }
}

module attributes {stable_mosaic.version = 11 : i64} {
  func.func @_sdpa_kernel(%arg0: i32, %arg1: i32, %arg2: memref<1x8x32xf32, #tpu.memory_space<vmem>>, %arg3: memref<1x8x32xf32, #tpu.memory_space<vmem>>, %arg4: memref<1x8x32xf32, #tpu.memory_space<vmem>>, %arg5: memref<1x8x32xf32, #tpu.memory_space<vmem>>, %arg6: memref<1x8x8xf32, #tpu.memory_space<vmem>>) attributes {dimension_semantics = [#tpu.dimension_semantics<parallel>, #tpu.dimension_semantics<parallel>], iteration_bounds = array<i64: 2, 1>, scalar_prefetch = 0 : i64, scratch_operands = 0 : i64, tpu.core_type = #tpu.core_type<tc>, window_params = [{transform_indices = @transform_0, window_bounds = array<i64: 1, 8, 32>}, {transform_indices = @transform_1, window_bounds = array<i64: 1, 8, 32>}, {transform_indices = @transform_2, window_bounds = array<i64: 1, 8, 32>}, {transform_indices = @transform_3, window_bounds = array<i64: 1, 8, 32>}, {transform_indices = @transform_4, window_bounds = array<i64: 1, 8, 8>}]} {
    %c0 = arith.constant 0 : index
    %c0_0 = arith.constant 0 : index
    %c0_1 = arith.constant 0 : index
    %0 = vector.load %arg2[%c0, %c0_0, %c0_1] : memref<1x8x32xf32, #tpu.memory_space<vmem>>, vector<1x8x32xf32>
    %1 = vector.shape_cast %0 : vector<1x8x32xf32> to vector<8x32xf32>
    %c0_2 = arith.constant 0 : index
    %c0_3 = arith.constant 0 : index
    %c0_4 = arith.constant 0 : index
    %2 = vector.load %arg3[%c0_2, %c0_3, %c0_4] : memref<1x8x32xf32, #tpu.memory_space<vmem>>, vector<1x8x32xf32>
    %3 = vector.shape_cast %2 : vector<1x8x32xf32> to vector<8x32xf32>
    %c0_5 = arith.constant 0 : index
    %c0_6 = arith.constant 0 : index
    %c0_7 = arith.constant 0 : index
    %4 = vector.load %arg4[%c0_5, %c0_6, %c0_7] : memref<1x8x32xf32, #tpu.memory_space<vmem>>, vector<1x8x32xf32>
    %5 = vector.shape_cast %4 : vector<1x8x32xf32> to vector<8x32xf32>
    %cst = arith.constant 0.176776692 : f32
    %6 = vector.broadcast %cst : f32 to vector<8x32xf32>
    %7 = arith.mulf %1, %6 : vector<8x32xf32>
    %cst_8 = arith.constant dense<0.000000e+00> : vector<8x8xf32>
    %8 = tpu.matmul %7, %3, %cst_8 {dimension_numbers = #tpu.dot_dimension_numbers<[1], [1], [0], [0], [0, 0, 1, 0], [], []>} : vector<8x32xf32>, vector<8x32xf32>, vector<8x8xf32> -> vector<8x8xf32>
    %cst_9 = arith.constant dense<0xFF800000> : vector<8xf32>
    %9 = vector.multi_reduction <maximumf>, %8, %cst_9 [1] : vector<8x8xf32> to vector<8xf32>
    %10 = vector.shape_cast %9 : vector<8xf32> to vector<8x1xf32>
    %11 = vector.broadcast %10 : vector<8x1xf32> to vector<8x8xf32>
    %12 = arith.subf %8, %11 : vector<8x8xf32>
    %13 = math.exp %12 : vector<8x8xf32>
    %cst_10 = arith.constant dense<0.000000e+00> : vector<8xf32>
    %14 = vector.multi_reduction <add>, %13, %cst_10 [1] : vector<8x8xf32> to vector<8xf32>
    %15 = vector.shape_cast %14 : vector<8xf32> to vector<8x1xf32>
    %16 = tpu.reciprocal %15 {approx = true} : vector<8x1xf32> -> vector<8x1xf32>
    %cst_11 = arith.constant dense<0.000000e+00> : vector<8x32xf32>
    %17 = tpu.matmul %13, %5, %cst_11 {dimension_numbers = #tpu.dot_dimension_numbers<[1], [0], [0], [1], [0, 0, 1, 1], [], []>} : vector<8x8xf32>, vector<8x32xf32>, vector<8x32xf32> -> vector<8x32xf32>
    %18 = vector.broadcast %16 : vector<8x1xf32> to vector<8x8xf32>
    %19 = arith.mulf %13, %18 : vector<8x8xf32>
    %c0_12 = arith.constant 0 : index
    %c0_13 = arith.constant 0 : index
    %c0_14 = arith.constant 0 : index
    %20 = vector.load %arg6[%c0_12, %c0_13, %c0_14] : memref<1x8x8xf32, #tpu.memory_space<vmem>>, vector<1x8x8xf32>
    %21 = vector.shape_cast %20 : vector<1x8x8xf32> to vector<8x8xf32>
    %22 = vector.shape_cast %19 : vector<8x8xf32> to vector<1x8x8xf32>
    tpu.vector_store %arg6[%c0_12, %c0_13, %c0_14], %22 {strides = array<i32>} : memref<1x8x8xf32, #tpu.memory_space<vmem>>, vector<1x8x8xf32>,
    %23 = vector.broadcast %16 : vector<8x1xf32> to vector<8x32xf32>
    %24 = arith.mulf %17, %23 : vector<8x32xf32>
    %c0_15 = arith.constant 0 : index
    %c0_16 = arith.constant 0 : index
    %c0_17 = arith.constant 0 : index
    %25 = vector.load %arg5[%c0_15, %c0_16, %c0_17] : memref<1x8x32xf32, #tpu.memory_space<vmem>>, vector<1x8x32xf32>
    %26 = vector.shape_cast %25 : vector<1x8x32xf32> to vector<8x32xf32>
    %27 = vector.shape_cast %24 : vector<8x32xf32> to vector<1x8x32xf32>
    tpu.vector_store %arg5[%c0_15, %c0_16, %c0_17], %27 {strides = array<i32>} : memref<1x8x32xf32, #tpu.memory_space<vmem>>, vector<1x8x32xf32>,
    return
  }
  func.func @transform_0(%arg0: i32, %arg1: i32) -> (i32, i32, i32) {
    %c0_i32 = arith.constant 0 : i32
    %c0_i32_0 = arith.constant 0 : i32
    return %arg0, %arg1, %c0_i32 : i32, i32, i32
  }
  func.func @transform_1(%arg0: i32, %arg1: i32) -> (i32, i32, i32) {
    %c0_i32 = arith.constant 0 : i32
    %c0_i32_0 = arith.constant 0 : i32
    %c0_i32_1 = arith.constant 0 : i32
    return %arg0, %c0_i32, %c0_i32_0 : i32, i32, i32
  }
  func.func @transform_2(%arg0: i32, %arg1: i32) -> (i32, i32, i32) {
    %c0_i32 = arith.constant 0 : i32
    %c0_i32_0 = arith.constant 0 : i32
    %c0_i32_1 = arith.constant 0 : i32
    return %arg0, %c0_i32, %c0_i32_0 : i32, i32, i32
  }
  func.func @transform_3(%arg0: i32, %arg1: i32) -> (i32, i32, i32) {
    %c0_i32 = arith.constant 0 : i32
    %c0_i32_0 = arith.constant 0 : i32
    return %arg0, %arg1, %c0_i32 : i32, i32, i32
  }
  func.func @transform_4(%arg0: i32, %arg1: i32) -> (i32, i32, i32) {
    %c0_i32 = arith.constant 0 : i32
    %c0_i32_0 = arith.constant 0 : i32
    return %arg0, %arg1, %c0_i32 : i32, i32, i32
  }
}

</mosaic_0001>

<llo_original>
// kernel: tpu_custom_call.1
$region0: #{tpu_custom_call.1}
  #allocation0 [shape = 'u32[]', space=smem, size = 0x4, offset = 0x4, fixed_abs, tag = 'smem constant byte address 0x4 - core index']
  #allocation1 [shape = 'u32[144,128]{1,0:T(1,128)}', space=vmem, size = 0x12000, scoped, tag = 'internal scratch']
  %s0 = inlined_call_operand.hbm [shape: f32[2,8,32], index: 0, kind: input, shape index: {}]
  %s1 = inlined_call_operand.hbm [shape: f32[2,8,32], index: 1, kind: input, shape index: {}]
  %s2 = inlined_call_operand.hbm [shape: f32[2,8,32], index: 2, kind: input, shape index: {}]
  %s3 = inlined_call_operand.hbm [shape: f32[2,8,32], index: 3, kind: output, shape index: {0}]
  %s4 = inlined_call_operand.hbm [shape: f32[2,8,8], index: 4, kind: output, shape index: {1}]
  %5 = xla_tuple %s3, %s4
  %s6 = sld [smem:[#allocation0]]
  $region65: #{tpu_custom_call.1} parent=0
    _
  %s8 = ssub.s32 1, %s6
  %s9 = scalar_select 0, %s8, %s6
  $region1: #{tpu_custom_call.1} parent=0
    #allocation2 [shape = 'u8[8192]{0}', space=vmem, size = 0x2000, scoped, tag = 'input window, operand 0']
    #allocation3 [shape = 's32[2]{0}', space=sflag, size = 0x8, scoped, tag = 'scoped memory for tpu_custom_call.1']
    #allocation4 [shape = 's32[2]{0}', space=sflag, size = 0x8, scoped, tag = 'scoped memory for tpu_custom_call.1']
    #allocation5 [shape = 'u8[4096]{0}', space=vmem, size = 0x1000, scoped, tag = 'input window, operand 1, single buffered']
    #allocation6 [shape = 's32[1]{0}', space=sflag, size = 0x4, scoped, tag = 'scoped memory for tpu_custom_call.1']
    #allocation7 [shape = 'u8[4096]{0}', space=vmem, size = 0x1000, scoped, tag = 'input window, operand 2, single buffered']
    #allocation8 [shape = 'u8[8192]{0}', space=vmem, size = 0x2000, scoped, tag = 'output window, operand 0']
    #allocation9 [shape = 'u8[8192]{0}', space=vmem, size = 0x2000, scoped, tag = 'output window, operand 1']
    #allocation10 [shape = 's32[2]{0}', space=sflag, size = 0x8, scoped, tag = 'scoped memory for tpu_custom_call.1']
    %10 = vsyncpa [#allocation3], 0
    %s11 = scalar_lea.sflag [#allocation3], 1
    %12 = vsyncpa %s11, 0
    %13 = vsyncpa [#allocation6], 0
    %14 = vsyncpa [#allocation4], 0
    %s15 = scalar_lea.sflag [#allocation4], 1
    %16 = vsyncpa %s15, 0
    %17 = vsyncpa [#allocation10], 0
    %s18 = scalar_lea.sflag [#allocation10], 1
    %19 = vsyncpa %s18, 0
    loop: start=0, step=1, limit=4
    $region2: #{tpu_custom_call.1} parent=1 // loop_pre_header
      _
    $region3: #{tpu_custom_call.1} parent=1 // loop_header
      %s21 = sphi 0, %s25
      %p22 = scmp.ge.s32.totalorder %s21, 4
      %s28 = sphi 0, %s40
      %s29 = sphi 0, %s36
      %s30 = sphi 0, %s28
      %s31 = sphi 0, %s29
      %s32 = sphi 0, %s30
      %s33 = sphi 0, %s31
      %s45 = sphi 0, %s47
      %s48 = sphi 0, %s45
      %s49 = sphi 0, %s48
      %s65 = sphi 0, %s49
      %s71 = sphi 0, %s73
      %s74 = sphi 0, %s71
      %s75 = sphi 0, %s74
      %s91 = sphi 0, %s75
      %s97 = sphi 0, %s99
      %s100 = sphi 0, %s97
      %s101 = sphi 0, %s100
      %s117 = sphi 0, %s101
      %s125 = sphi 0, %s127
      %s128 = sphi 0, %s125
      %s129 = sphi 0, %s128
      %s145 = sphi 0, %s129
      %s153 = sphi 0, %s155
      %s156 = sphi 0, %s153
      %s157 = sphi 0, %s156
      %s173 = sphi 0, %s157
    $region4: #{tpu_custom_call.1} parent=1 // loop_header_branch
      %24 = sbr.rel (%p22) target = $region8
    $region5: #{tpu_custom_call.1} parent=1 // loop_body
      %s26 = ssub.s32 %s21, 1
      %s27 = ssub.s32 %s21, 2
      %s34 = sadd.s32 1, %s29
      %p35 = scmp.ge.s32.totalorder %s34, 1
      %s36 = scalar_select %p35, 0, %s34
      %s37 = sadd.s32 1, %s28
      %s38 = scalar_select %p35, %s37, %s28
      %p39 = scmp.ge.s32.totalorder %s38, 2
      %s40 = scalar_select %p39, 0, %s38
      %s41 = ssub.s32 %s28, %s40
      %s42 = ssub.s32 %s29, %s36
      %s43 = sor.u32 %s41, %s42
      %p44 = scmp.eq.s32.totalorder %s43, 0
      %s46 = sadd.s32 %s45, 1
      %s47 = scalar_select %p44, %s45, %s46
      %p50 = pneg %p44
      %p51 = scmp.eq.s32.totalorder %s21, 1
      %p52 = por %p50, %p51
      %p53 = scmp.ne.s32.totalorder %s45, %s48
      %p54 = scmp.eq.s32.totalorder %s21, 0
      %p55 = por %p53, %p54
      %p56 = scmp.ne.s32.totalorder %s45, %s48
      %p57 = scmp.eq.s32.totalorder %s26, 1
      %p58 = por %p56, %p57
      %p59 = scmp.ne.s32.totalorder %s48, %s49
      %p60 = scmp.eq.s32.totalorder %s26, 0
      %p61 = por %p59, %p60
      %p62 = scmp.ne.s32.totalorder %s48, %s49
      %p63 = scmp.eq.s32.totalorder %s27, 1
      %p64 = por %p62, %p63
      %p66 = scmp.ne.s32.totalorder %s49, %s65
      %p67 = scmp.eq.s32.totalorder %s27, 0
      %p68 = por %p66, %p67
      %s69 = ssub.s32 %s28, %s40
      %p70 = scmp.eq.s32.totalorder %s69, 0
      %s72 = sadd.s32 %s71, 1
      %s73 = scalar_select %p70, %s71, %s72
      %p76 = pneg %p70
      %p77 = scmp.eq.s32.totalorder %s21, 1
      %p78 = por %p76, %p77
      %p79 = scmp.ne.s32.totalorder %s71, %s74
      %p80 = scmp.eq.s32.totalorder %s21, 0
      %p81 = por %p79, %p80
      %p82 = scmp.ne.s32.totalorder %s71, %s74
      %p83 = scmp.eq.s32.totalorder %s26, 1
      %p84 = por %p82, %p83
      %p85 = scmp.ne.s32.totalorder %s74, %s75
      %p86 = scmp.eq.s32.totalorder %s26, 0
      %p87 = por %p85, %p86
      %p88 = scmp.ne.s32.totalorder %s74, %s75
      %p89 = scmp.eq.s32.totalorder %s27, 1
      %p90 = por %p88, %p89
      %p92 = scmp.ne.s32.totalorder %s75, %s91
      %p93 = scmp.eq.s32.totalorder %s27, 0
      %p94 = por %p92, %p93
      %s95 = ssub.s32 %s28, %s40
      %p96 = scmp.eq.s32.totalorder %s95, 0
      %s98 = sadd.s32 %s97, 1
      %s99 = scalar_select %p96, %s97, %s98
      %p102 = pneg %p96
      %p103 = scmp.eq.s32.totalorder %s21, 1
      %p104 = por %p102, %p103
      %p105 = scmp.ne.s32.totalorder %s97, %s100
      %p106 = scmp.eq.s32.totalorder %s21, 0
      %p107 = por %p105, %p106
      %p108 = scmp.ne.s32.totalorder %s97, %s100
      %p109 = scmp.eq.s32.totalorder %s26, 1
      %p110 = por %p108, %p109
      %p111 = scmp.ne.s32.totalorder %s100, %s101
      %p112 = scmp.eq.s32.totalorder %s26, 0
      %p113 = por %p111, %p112
      %p114 = scmp.ne.s32.totalorder %s100, %s101
      %p115 = scmp.eq.s32.totalorder %s27, 1
      %p116 = por %p114, %p115
      %p118 = scmp.ne.s32.totalorder %s101, %s117
      %p119 = scmp.eq.s32.totalorder %s27, 0
      %p120 = por %p118, %p119
      %s121 = ssub.s32 %s28, %s40
      %s122 = ssub.s32 %s29, %s36
      %s123 = sor.u32 %s121, %s122
      %p124 = scmp.eq.s32.totalorder %s123, 0
      %s126 = sadd.s32 %s125, 1
      %s127 = scalar_select %p124, %s125, %s126
      %p130 = pneg %p124
      %p131 = scmp.eq.s32.totalorder %s21, 1
      %p132 = por %p130, %p131
      %p133 = scmp.ne.s32.totalorder %s125, %s128
      %p134 = scmp.eq.s32.totalorder %s21, 0
      %p135 = por %p133, %p134
      %p136 = scmp.ne.s32.totalorder %s125, %s128
      %p137 = scmp.eq.s32.totalorder %s26, 1
      %p138 = por %p136, %p137
      %p139 = scmp.ne.s32.totalorder %s128, %s129
      %p140 = scmp.eq.s32.totalorder %s26, 0
      %p141 = por %p139, %p140
      %p142 = scmp.ne.s32.totalorder %s128, %s129
      %p143 = scmp.eq.s32.totalorder %s27, 1
      %p144 = por %p142, %p143
      %p146 = scmp.ne.s32.totalorder %s129, %s145
      %p147 = scmp.eq.s32.totalorder %s27, 0
      %p148 = por %p146, %p147
      %s149 = ssub.s32 %s28, %s40
      %s150 = ssub.s32 %s29, %s36
      %s151 = sor.u32 %s149, %s150
      %p152 = scmp.eq.s32.totalorder %s151, 0
      %s154 = sadd.s32 %s153, 1
      %s155 = scalar_select %p152, %s153, %s154
      %p158 = pneg %p152
      %p159 = scmp.eq.s32.totalorder %s21, 1
      %p160 = por %p158, %p159
      %p161 = scmp.ne.s32.totalorder %s153, %s156
      %p162 = scmp.eq.s32.totalorder %s21, 0
      %p163 = por %p161, %p162
      %p164 = scmp.ne.s32.totalorder %s153, %s156
      %p165 = scmp.eq.s32.totalorder %s26, 1
      %p166 = por %p164, %p165
      %p167 = scmp.ne.s32.totalorder %s156, %s157
      %p168 = scmp.eq.s32.totalorder %s26, 0
      %p169 = por %p167, %p168
      %p170 = scmp.ne.s32.totalorder %s156, %s157
      %p171 = scmp.eq.s32.totalorder %s27, 1
      %p172 = por %p170, %p171
      %p174 = scmp.ne.s32.totalorder %s157, %s173
      %p175 = scmp.eq.s32.totalorder %s27, 0
      %p176 = por %p174, %p175
      %p177 = scmp.le.s32.totalorder 1, %s21
      %p178 = scmp.lt.s32.totalorder %s21, 3
      %p179 = pnand %p177, %p178
      %p180 = pneg %p179
      // Predicated region
      $region9: #{tpu_custom_call.1} parent=5 // pred_check
        _
      $region10: #{tpu_custom_call.1} parent=5 // pred_check_branch
        %182 = sbr.rel (%p179) target = $region12
      $region11: #{tpu_custom_call.1} parent=5 // pred_region
        %s183 = ssub.s32 %s21, 1
        // Predicated region
        $region13: #{tpu_custom_call.1} parent=11 // pred_check
          %p184 = pneg %p87
        $region14: #{tpu_custom_call.1} parent=11 // pred_check_branch
          %186 = sbr.rel (%p184) target = $region16
        $region15: #{tpu_custom_call.1} parent=11 // pred_region
          %s188 = ssub.s32 128, 128
          %189 = vsyncadd [#allocation6], %s188
          %s190 = smul.addr %s30, 128
          %s191 = scalar_lea.hbm %s1, %s190
          %s193 = sshll.u32 [#allocation5], 4
          %s194 = int_to_ptr.vmem [resolvable:$true] %s193
          %196 = dma.hbm_to_vmem [thread:$0]  %s191, 128, %s194, [#allocation6]
        $region16: #{tpu_custom_call.1} parent=11 // pred_fallthru
          _
        // Predicated region
        $region17: #{tpu_custom_call.1} parent=11 // pred_check
          %p197 = pneg %p113
        $region18: #{tpu_custom_call.1} parent=11 // pred_check_branch
          %199 = sbr.rel (%p197) target = $region20
        $region19: #{tpu_custom_call.1} parent=11 // pred_region
          %s201 = ssub.s32 128, 128
          %202 = vsyncadd [#allocation6], %s201
          %s203 = smul.addr %s30, 128
          %s204 = scalar_lea.hbm %s2, %s203
          %s206 = sshll.u32 [#allocation7], 4
          %s207 = int_to_ptr.vmem [resolvable:$true] %s206
          %209 = dma.hbm_to_vmem [thread:$0]  %s204, 128, %s207, [#allocation6]
        $region20: #{tpu_custom_call.1} parent=11 // pred_fallthru
          _
      $region12: #{tpu_custom_call.1} parent=5 // pred_fallthru
        _
      %p210 = scmp.lt.s32.totalorder %s21, 2
      // Predicated region
      $region21: #{tpu_custom_call.1} parent=5 // pred_check
        %p211 = pneg %p210
      $region22: #{tpu_custom_call.1} parent=5 // pred_check_branch
        %213 = sbr.rel (%p211) target = $region24
      $region23: #{tpu_custom_call.1} parent=5 // pred_region
        // Predicated region
        $region25: #{tpu_custom_call.1} parent=23 // pred_check
          %p214 = pneg %p55
        $region26: #{tpu_custom_call.1} parent=23 // pred_check_branch
          %216 = sbr.rel (%p214) target = $region28
        $region27: #{tpu_custom_call.1} parent=23 // pred_region
          %s217 = sand.u32 %s45, 1
          %s218 = scalar_lea.sflag [#allocation3], %s217
          %s219 = sand.u32 %s45, 1
          %s220 = smul.addr %s219, 8
          %s221 = scalar_lea.vmem [#allocation2], %s220
          %s223 = ssub.s32 128, 128
          %224 = vsyncadd %s218, %s223
          %s225 = sadd.s32 %s29, %s28
          %s226 = smul.addr %s225, 128
          %s227 = scalar_lea.hbm %s0, %s226
          %s229 = sshll.u32 %s221, 4
          %s230 = int_to_ptr.vmem [resolvable:$true] %s229
          %232 = dma.hbm_to_vmem [thread:$0]  %s227, 128, %s230, %s218
        $region28: #{tpu_custom_call.1} parent=23 // pred_fallthru
          _
      $region24: #{tpu_custom_call.1} parent=5 // pred_fallthru
        _
      %p233 = scmp.le.s32.totalorder 1, %s21
      %p234 = scmp.lt.s32.totalorder %s21, 3
      %p235 = pnand %p233, %p234
      %p236 = pneg %p235
      // Predicated region
      $region29: #{tpu_custom_call.1} parent=5 // pred_check
        _
      $region30: #{tpu_custom_call.1} parent=5 // pred_check_branch
        %238 = sbr.rel (%p235) target = $region32
      $region31: #{tpu_custom_call.1} parent=5 // pred_region
        %s239 = ssub.s32 %s21, 1
        %s240 = sand.u32 %s48, 1
        %s241 = scalar_lea.sflag [#allocation3], %s240
        %s242 = sand.u32 %s48, 1
        %s243 = smul.addr %s242, 8
        %s244 = scalar_lea.vmem [#allocation2], %s243
        // Predicated region
        $region33: #{tpu_custom_call.1} parent=31 // pred_check
          %p245 = pneg %p61
        $region34: #{tpu_custom_call.1} parent=31 // pred_check_branch
          %247 = sbr.rel (%p245) target = $region36
        $region35: #{tpu_custom_call.1} parent=31 // pred_region
          %248 = dma.done %s241, 128
        $region36: #{tpu_custom_call.1} parent=31 // pred_fallthru
          _
        // Predicated region
        $region37: #{tpu_custom_call.1} parent=31 // pred_check
          %p249 = pneg %p87
        $region38: #{tpu_custom_call.1} parent=31 // pred_check_branch
          %251 = sbr.rel (%p249) target = $region40
        $region39: #{tpu_custom_call.1} parent=31 // pred_region
          %252 = dma.done [#allocation6], 128
        $region40: #{tpu_custom_call.1} parent=31 // pred_fallthru
          _
        // Predicated region
        $region41: #{tpu_custom_call.1} parent=31 // pred_check
          %p253 = pneg %p113
        $region42: #{tpu_custom_call.1} parent=31 // pred_check_branch
          %255 = sbr.rel (%p253) target = $region44
        $region43: #{tpu_custom_call.1} parent=31 // pred_region
          %256 = dma.done [#allocation6], 128
        $region44: #{tpu_custom_call.1} parent=31 // pred_fallthru
          _
        %s257 = sand.u32 %s48, 1
        %s258 = scalar_lea.sflag [#allocation3], %s257
        %s259 = sand.u32 %s48, 1
        %s260 = smul.addr %s259, 8
        %s261 = scalar_lea.vmem [#allocation2], %s260
        %p262 = pneg %p61
        %p263 = pneg %p58
        %p264 = pneg %p87
        %p265 = pneg %p84
        %p266 = pneg %p113
        %p267 = pneg %p110
        %p268 = pneg %p141
        %p269 = pneg %p138
        %s270 = sand.u32 %s128, 1
        %s271 = scalar_lea.sflag [#allocation4], %s270
        %s272 = sand.u32 %s128, 1
        %s273 = smul.addr %s272, 8
        %s274 = scalar_lea.vmem [#allocation8], %s273
        %p275 = pneg %p169
        %p276 = pneg %p166
        %s277 = sand.u32 %s156, 1
        %s278 = scalar_lea.sflag [#allocation10], %s277
        %s279 = sand.u32 %s156, 1
        %s280 = smul.addr %s279, 8
        %s281 = scalar_lea.vmem [#allocation9], %s280
        %v282 = vld [vmem:[%s244] sm:$0xff]
        %v283 = vld [vmem:[#allocation5] sm:$0xff]
        %v284 = vld [vmem:[#allocation7] sm:$0xff]
        %v285 = vmul.f32 %v282, 0.17677669
        %vm286 = vcmask 261120
        %v288 = vsel %vm286, %v285, 0
        %v291 = vsel %vm286, %v283, 0
        %293 = vmatprep.subr.mxu0 0.0
        %294 = vmatpush1.xpose.msra.mxu0 0.0
        %295 = vmatprep.subr.mxu0 0.0
        %296 = vmatpush1.xpose.msra.mxu0 0.0
        %297 = vmatprep.subr.mxu0 0.0
        %298 = vmatpush1.xpose.msra.mxu0 0.0
        %299 = vmatprep.subr.mxu0 0.0
        %300 = vmatpush1.xpose.msra.mxu0 0.0
        %301 = vmatprep.subr.mxu0 0.0
        %302 = vmatpush1.xpose.msra.mxu0 0.0
        %303 = vmatprep.subr.mxu0 0.0
        %304 = vmatpush1.xpose.msra.mxu0 0.0
        %305 = vmatprep.subr.mxu0 0.0
        %306 = vmatpush1.xpose.msra.mxu0 0.0
        %307 = vmatprep.subr.mxu0 0.0
        %308 = vmatpush1.xpose.msra.mxu0 0.0
        %309 = vmatprep.subr.mxu0 0.0
        %310 = vmatpush1.xpose.msra.mxu0 0.0
        %311 = vmatprep.subr.mxu0 0.0
        %312 = vmatpush1.xpose.msra.mxu0 0.0
        %313 = vmatprep.subr.mxu0 0.0
        %314 = vmatpush1.xpose.msra.mxu0 0.0
        %315 = vmatprep.subr.mxu0 0.0
        %316 = vmatpush1.xpose.msra.mxu0 0.0
        %317 = vmatprep.subr.mxu0 0.0
        %318 = vmatpush1.xpose.msra.mxu0 0.0
        %319 = vmatprep.subr.mxu0 0.0
        %320 = vmatpush1.xpose.msra.mxu0 0.0
        %321 = vmatprep.subr.mxu0 0.0
        %322 = vmatpush1.xpose.msra.mxu0 0.0
        %323 = vmatprep.subr.mxu0 0.0
        %324 = vmatpush1.xpose.msra.mxu0 %v291
        %325 = vmatprep.subr.mxu0 0.0
        %326 = vmatpush2.xpose.msra.mxu0 0.0
        %327 = vmatprep.subr.mxu0 0.0
        %328 = vmatpush2.xpose.msra.mxu0 0.0
        %329 = vmatprep.subr.mxu0 0.0
        %330 = vmatpush2.xpose.msra.mxu0 0.0
        %331 = vmatprep.subr.mxu0 0.0
        %332 = vmatpush2.xpose.msra.mxu0 0.0
        %333 = vmatprep.subr.mxu0 0.0
        %334 = vmatpush2.xpose.msra.mxu0 0.0
        %335 = vmatprep.subr.mxu0 0.0
        %336 = vmatpush2.xpose.msra.mxu0 0.0
        %337 = vmatprep.subr.mxu0 0.0
        %338 = vmatpush2.xpose.msra.mxu0 0.0
        %339 = vmatprep.subr.mxu0 0.0
        %340 = vmatpush2.xpose.msra.mxu0 0.0
        %341 = vmatprep.subr.mxu0 0.0
        %342 = vmatpush2.xpose.msra.mxu0 0.0
        %343 = vmatprep.subr.mxu0 0.0
        %344 = vmatpush2.xpose.msra.mxu0 0.0
        %345 = vmatprep.subr.mxu0 0.0
        %346 = vmatpush2.xpose.msra.mxu0 0.0
        %347 = vmatprep.subr.mxu0 0.0
        %348 = vmatpush2.xpose.msra.mxu0 0.0
        %349 = vmatprep.subr.mxu0 0.0
        %350 = vmatpush2.xpose.msra.mxu0 0.0
        %351 = vmatprep.subr.mxu0 0.0
        %352 = vmatpush2.xpose.msra.mxu0 0.0
        %353 = vmatprep.subr.mxu0 0.0
        %354 = vmatpush2.xpose.msra.mxu0 0.0
        %355 = vmatprep.subr.mxu0 0.0
        %356 = vmatpush2.xpose.msra.mxu0 0.0
        %357 = vmatprep.mubr.f32.mxu0 0.0
        %358 = vmatmul.mubr.f32.gmra.mxu0 %v288
        %v359 = vpop.f32.mrf.mxu0
        %v360 = vadd.f32 0.0, %v359
        %v361 = vpop.f32.mrf.mxu0
        %362 = vdwg.mxu0
        %vm363 = vcmask 64512
        %v364 = vsel %vm363, %v360, -inf
        %365 = vmax.xlane.f32.xlu0 %v364
        %v366 = vpop.xlane.xlu0 %365
        %v367 = vsub.f32 %v360, %v366
        %v368 = vmul.f32 %v367, 1.442695
        %v369 = vpow.pop %v368
        %v370 = vsel %vm363, %v369, 0.0
        %371 = vadd.xlane.f32.xlu0 %v370
        %v372 = vpop.xlane.xlu0 %371
        %v373 = vrcp.pop %v372
        %v375 = vsel %vm363, %v369, 0
        %377 = vmatprep.subr.mxu0 0.0
        %378 = vmatpush1.msra.mxu0 0.0
        %379 = vmatprep.subr.mxu0 0.0
        %380 = vmatpush1.msra.mxu0 0.0
        %381 = vmatprep.subr.mxu0 0.0
        %382 = vmatpush1.msra.mxu0 0.0
        %383 = vmatprep.subr.mxu0 0.0
        %384 = vmatpush1.msra.mxu0 0.0
        %385 = vmatprep.subr.mxu0 0.0
        %386 = vmatpush1.msra.mxu0 0.0
        %387 = vmatprep.subr.mxu0 0.0
        %388 = vmatpush1.msra.mxu0 0.0
        %389 = vmatprep.subr.mxu0 0.0
        %390 = vmatpush1.msra.mxu0 0.0
        %391 = vmatprep.subr.mxu0 0.0
        %392 = vmatpush1.msra.mxu0 0.0
        %393 = vmatprep.subr.mxu0 0.0
        %394 = vmatpush1.msra.mxu0 0.0
        %395 = vmatprep.subr.mxu0 0.0
        %396 = vmatpush1.msra.mxu0 0.0
        %397 = vmatprep.subr.mxu0 0.0
        %398 = vmatpush1.msra.mxu0 0.0
        %399 = vmatprep.subr.mxu0 0.0
        %400 = vmatpush1.msra.mxu0 0.0
        %401 = vmatprep.subr.mxu0 0.0
        %402 = vmatpush1.msra.mxu0 0.0
        %403 = vmatprep.subr.mxu0 0.0
        %404 = vmatpush1.msra.mxu0 0.0
        %405 = vmatprep.subr.mxu0 0.0
        %406 = vmatpush1.msra.mxu0 0.0
        %407 = vmatprep.subr.mxu0 0.0
        %408 = vmatpush1.msra.mxu0 %v284
        %409 = vmatprep.subr.mxu0 0.0
        %410 = vmatpush2.msra.mxu0 0.0
        %411 = vmatprep.subr.mxu0 0.0
        %412 = vmatpush2.msra.mxu0 0.0
        %413 = vmatprep.subr.mxu0 0.0
        %414 = vmatpush2.msra.mxu0 0.0
        %415 = vmatprep.subr.mxu0 0.0
        %416 = vmatpush2.msra.mxu0 0.0
        %417 = vmatprep.subr.mxu0 0.0
        %418 = vmatpush2.msra.mxu0 0.0
        %419 = vmatprep.subr.mxu0 0.0
        %420 = vmatpush2.msra.mxu0 0.0
        %421 = vmatprep.subr.mxu0 0.0
        %422 = vmatpush2.msra.mxu0 0.0
        %423 = vmatprep.subr.mxu0 0.0
        %424 = vmatpush2.msra.mxu0 0.0
        %425 = vmatprep.subr.mxu0 0.0
        %426 = vmatpush2.msra.mxu0 0.0
        %427 = vmatprep.subr.mxu0 0.0
        %428 = vmatpush2.msra.mxu0 0.0
        %429 = vmatprep.subr.mxu0 0.0
        %430 = vmatpush2.msra.mxu0 0.0
        %431 = vmatprep.subr.mxu0 0.0
        %432 = vmatpush2.msra.mxu0 0.0
        %433 = vmatprep.subr.mxu0 0.0
        %434 = vmatpush2.msra.mxu0 0.0
        %435 = vmatprep.subr.mxu0 0.0
        %436 = vmatpush2.msra.mxu0 0.0
        %437 = vmatprep.subr.mxu0 0.0
        %438 = vmatpush2.msra.mxu0 0.0
        %439 = vmatprep.subr.mxu0 0.0
        %440 = vmatpush2.msra.mxu0 0.0
        %441 = vmatprep.mubr.f32.mxu0 0.0
        %442 = vmatmul.mubr.f32.gmra.mxu0 %v375
        %v443 = vpop.f32.mrf.mxu0
        %v444 = vadd.f32 0.0, %v443
        %v445 = vpop.f32.mrf.mxu0
        %446 = vdwg.mxu0
        %v447 = vmul.f32 %v369, %v373
        %448 = vst.msk [vmem:[%s281] sm:$0xff] %vm363, %v447
        %v449 = vmul.f32 %v444, %v373
        %450 = vst.msk [vmem:[%s274] sm:$0xff] %vm286, %v449
        %s451 = sand.u32 %s128, 1
        %s452 = scalar_lea.sflag [#allocation4], %s451
        %s453 = sand.u32 %s128, 1
        %s454 = smul.addr %s453, 8
        %s455 = scalar_lea.vmem [#allocation8], %s454
        %s456 = sand.u32 %s156, 1
        %s457 = scalar_lea.sflag [#allocation10], %s456
        %s458 = sand.u32 %s156, 1
        %s459 = smul.addr %s458, 8
        %s460 = scalar_lea.vmem [#allocation9], %s459
        // Predicated region
        $region45: #{tpu_custom_call.1} parent=31 // pred_check
          %p461 = pneg %p138
        $region46: #{tpu_custom_call.1} parent=31 // pred_check_branch
          %463 = sbr.rel (%p461) target = $region48
        $region47: #{tpu_custom_call.1} parent=31 // pred_region
          %s465 = ssub.s32 128, 128
          %466 = vsyncadd %s452, %s465
          %s467 = sadd.s32 %s31, %s30
          %s468 = smul.addr %s467, 128
          %s469 = scalar_lea.hbm %s3, %s468
          %s471 = sshll.u32 %s455, 4
          %s472 = int_to_ptr.vmem [resolvable:$true] %s471
          %474 = dma.vmem_to_hbm [thread:$0]  %s472, 128, %s469, %s452
        $region48: #{tpu_custom_call.1} parent=31 // pred_fallthru
          _
        // Predicated region
        $region49: #{tpu_custom_call.1} parent=31 // pred_check
          %p475 = pneg %p166
        $region50: #{tpu_custom_call.1} parent=31 // pred_check_branch
          %477 = sbr.rel (%p475) target = $region52
        $region51: #{tpu_custom_call.1} parent=31 // pred_region
          %s479 = ssub.s32 128, 128
          %480 = vsyncadd %s457, %s479
          %s481 = sadd.s32 %s31, %s30
          %s482 = smul.addr %s481, 128
          %s483 = scalar_lea.hbm %s4, %s482
          %s485 = sshll.u32 %s460, 4
          %s486 = int_to_ptr.vmem [resolvable:$true] %s485
          %488 = dma.vmem_to_hbm [thread:$0]  %s486, 128, %s483, %s457
        $region52: #{tpu_custom_call.1} parent=31 // pred_fallthru
          _
      $region32: #{tpu_custom_call.1} parent=5 // pred_fallthru
        _
      %p489 = scmp.le.s32.totalorder 2, %s21
      // Predicated region
      $region53: #{tpu_custom_call.1} parent=5 // pred_check
        %p490 = pneg %p489
      $region54: #{tpu_custom_call.1} parent=5 // pred_check_branch
        %492 = sbr.rel (%p490) target = $region56
      $region55: #{tpu_custom_call.1} parent=5 // pred_region
        %s493 = ssub.s32 %s21, 2
        // Predicated region
        $region57: #{tpu_custom_call.1} parent=55 // pred_check
          %p494 = pneg %p144
        $region58: #{tpu_custom_call.1} parent=55 // pred_check_branch
          %496 = sbr.rel (%p494) target = $region60
        $region59: #{tpu_custom_call.1} parent=55 // pred_region
          %s497 = sand.u32 %s129, 1
          %s498 = scalar_lea.sflag [#allocation4], %s497
          %s499 = sand.u32 %s129, 1
          %s500 = smul.addr %s499, 8
          %s501 = scalar_lea.vmem [#allocation8], %s500
          %502 = dma.done %s498, 128
        $region60: #{tpu_custom_call.1} parent=55 // pred_fallthru
          _
        // Predicated region
        $region61: #{tpu_custom_call.1} parent=55 // pred_check
          %p503 = pneg %p172
        $region62: #{tpu_custom_call.1} parent=55 // pred_check_branch
          %505 = sbr.rel (%p503) target = $region64
        $region63: #{tpu_custom_call.1} parent=55 // pred_region
          %s506 = sand.u32 %s157, 1
          %s507 = scalar_lea.sflag [#allocation10], %s506
          %s508 = sand.u32 %s157, 1
          %s509 = smul.addr %s508, 8
          %s510 = scalar_lea.vmem [#allocation9], %s509
          %511 = dma.done %s507, 128
        $region64: #{tpu_custom_call.1} parent=55 // pred_fallthru
          _
      $region56: #{tpu_custom_call.1} parent=5 // pred_fallthru
        _
    $region6: #{tpu_custom_call.1} parent=1 // loop_footer
      %s25 = sadd.s32 1, %s21
    $region7: #{tpu_custom_call.1} parent=1 // loop_footer_branch
      %20 = sbr.rel target = $region3
    $region8: #{tpu_custom_call.1} parent=1 // loop_exit
      _
    %512 = vsyncpa [#allocation3], 1
    %s513 = scalar_lea.sflag [#allocation3], 1
    %514 = vsyncpa %s513, 1
    %515 = vsyncpa [#allocation6], 1
    %516 = vsyncpa [#allocation4], 1
    %s517 = scalar_lea.sflag [#allocation4], 1
    %518 = vsyncpa %s517, 1
    %519 = vsyncpa [#allocation10], 1
    %s520 = scalar_lea.sflag [#allocation10], 1
    %521 = vsyncpa %s520, 1

// kernel: tpu_custom_call.1
$region0: #{tpu_custom_call.1}
  #allocation0 [shape = 'u32[]', space=smem, size = 0x4, offset = 0x4, fixed_abs, tag = 'smem constant byte address 0x4 - core index']
  #allocation1 [shape = 'u32[144,128]{1,0:T(1,128)}', space=vmem, size = 0x12000, scoped, tag = 'internal scratch']
  %s0 = inlined_call_operand.hbm [shape: f32[2,8,32], index: 0, kind: input, shape index: {}]
  %s1 = inlined_call_operand.hbm [shape: f32[2,8,32], index: 1, kind: input, shape index: {}]
  %s2 = inlined_call_operand.hbm [shape: f32[2,8,32], index: 2, kind: input, shape index: {}]
  %s3 = inlined_call_operand.hbm [shape: f32[2,8,32], index: 3, kind: output, shape index: {0}]
  %s4 = inlined_call_operand.hbm [shape: f32[2,8,8], index: 4, kind: output, shape index: {1}]
  %5 = xla_tuple %s3, %s4
  %s6 = sld [smem:[#allocation0]]
  $region65: #{tpu_custom_call.1} parent=0
    _
  %s8 = ssub.s32 1, %s6
  %s9 = scalar_select 0, %s8, %s6
  $region1: #{tpu_custom_call.1} parent=0
    #allocation2 [shape = 'u8[8192]{0}', space=vmem, size = 0x2000, scoped, tag = 'input window, operand 0']
    #allocation3 [shape = 's32[2]{0}', space=sflag, size = 0x8, scoped, tag = 'scoped memory for tpu_custom_call.1']
    #allocation4 [shape = 's32[2]{0}', space=sflag, size = 0x8, scoped, tag = 'scoped memory for tpu_custom_call.1']
    #allocation5 [shape = 'u8[8192]{0}', space=vmem, size = 0x2000, scoped, tag = 'input window, operand 1']
    #allocation6 [shape = 's32[2]{0}', space=sflag, size = 0x8, scoped, tag = 'scoped memory for tpu_custom_call.1']
    #allocation7 [shape = 'u8[8192]{0}', space=vmem, size = 0x2000, scoped, tag = 'input window, operand 2']
    #allocation8 [shape = 'u8[8192]{0}', space=vmem, size = 0x2000, scoped, tag = 'output window, operand 0']
    #allocation9 [shape = 'u8[8192]{0}', space=vmem, size = 0x2000, scoped, tag = 'output window, operand 1']
    #allocation10 [shape = 's32[2]{0}', space=sflag, size = 0x8, scoped, tag = 'scoped memory for tpu_custom_call.1']
    %10 = vsyncpa [#allocation3], 0
    %s11 = scalar_lea.sflag [#allocation3], 1
    %12 = vsyncpa %s11, 0
    %13 = vsyncpa [#allocation6], 0
    %s14 = scalar_lea.sflag [#allocation6], 1
    %15 = vsyncpa %s14, 0
    %16 = vsyncpa [#allocation4], 0
    %s17 = scalar_lea.sflag [#allocation4], 1
    %18 = vsyncpa %s17, 0
    %19 = vsyncpa [#allocation10], 0
    %s20 = scalar_lea.sflag [#allocation10], 1
    %21 = vsyncpa %s20, 0
    loop: start=0, step=1, limit=4
    $region2: #{tpu_custom_call.1} parent=1 // loop_pre_header
      _
    $region3: #{tpu_custom_call.1} parent=1 // loop_header
      %s23 = sphi 0, %s27
      %p24 = scmp.ge.s32.totalorder %s23, 4
      %s30 = sphi 0, %s42
      %s31 = sphi 0, %s38
      %s32 = sphi 0, %s30
      %s33 = sphi 0, %s31
      %s34 = sphi 0, %s32
      %s35 = sphi 0, %s33
      %s47 = sphi 0, %s49
      %s50 = sphi 0, %s47
      %s51 = sphi 0, %s50
      %s67 = sphi 0, %s51
      %s73 = sphi 0, %s75
      %s76 = sphi 0, %s73
      %s77 = sphi 0, %s76
      %s93 = sphi 0, %s77
      %s99 = sphi 0, %s101
      %s102 = sphi 0, %s99
      %s103 = sphi 0, %s102
      %s119 = sphi 0, %s103
      %s127 = sphi 0, %s129
      %s130 = sphi 0, %s127
      %s131 = sphi 0, %s130
      %s147 = sphi 0, %s131
      %s155 = sphi 0, %s157
      %s158 = sphi 0, %s155
      %s159 = sphi 0, %s158
      %s175 = sphi 0, %s159
    $region4: #{tpu_custom_call.1} parent=1 // loop_header_branch
      %26 = sbr.rel (%p24) target = $region8
    $region5: #{tpu_custom_call.1} parent=1 // loop_body
      %s28 = ssub.s32 %s23, 1
      %s29 = ssub.s32 %s23, 2
      %s36 = sadd.s32 1, %s31
      %p37 = scmp.ge.s32.totalorder %s36, 1
      %s38 = scalar_select %p37, 0, %s36
      %s39 = sadd.s32 1, %s30
      %s40 = scalar_select %p37, %s39, %s30
      %p41 = scmp.ge.s32.totalorder %s40, 2
      %s42 = scalar_select %p41, 0, %s40
      %s43 = ssub.s32 %s30, %s42
      %s44 = ssub.s32 %s31, %s38
      %s45 = sor.u32 %s43, %s44
      %p46 = scmp.eq.s32.totalorder %s45, 0
      %s48 = sadd.s32 %s47, 1
      %s49 = scalar_select %p46, %s47, %s48
      %p52 = pneg %p46
      %p53 = scmp.eq.s32.totalorder %s23, 1
      %p54 = por %p52, %p53
      %p55 = scmp.ne.s32.totalorder %s47, %s50
      %p56 = scmp.eq.s32.totalorder %s23, 0
      %p57 = por %p55, %p56
      %p58 = scmp.ne.s32.totalorder %s47, %s50
      %p59 = scmp.eq.s32.totalorder %s28, 1
      %p60 = por %p58, %p59
      %p61 = scmp.ne.s32.totalorder %s50, %s51
      %p62 = scmp.eq.s32.totalorder %s28, 0
      %p63 = por %p61, %p62
      %p64 = scmp.ne.s32.totalorder %s50, %s51
      %p65 = scmp.eq.s32.totalorder %s29, 1
      %p66 = por %p64, %p65
      %p68 = scmp.ne.s32.totalorder %s51, %s67
      %p69 = scmp.eq.s32.totalorder %s29, 0
      %p70 = por %p68, %p69
      %s71 = ssub.s32 %s30, %s42
      %p72 = scmp.eq.s32.totalorder %s71, 0
      %s74 = sadd.s32 %s73, 1
      %s75 = scalar_select %p72, %s73, %s74
      %p78 = pneg %p72
      %p79 = scmp.eq.s32.totalorder %s23, 1
      %p80 = por %p78, %p79
      %p81 = scmp.ne.s32.totalorder %s73, %s76
      %p82 = scmp.eq.s32.totalorder %s23, 0
      %p83 = por %p81, %p82
      %p84 = scmp.ne.s32.totalorder %s73, %s76
      %p85 = scmp.eq.s32.totalorder %s28, 1
      %p86 = por %p84, %p85
      %p87 = scmp.ne.s32.totalorder %s76, %s77
      %p88 = scmp.eq.s32.totalorder %s28, 0
      %p89 = por %p87, %p88
      %p90 = scmp.ne.s32.totalorder %s76, %s77
      %p91 = scmp.eq.s32.totalorder %s29, 1
      %p92 = por %p90, %p91
      %p94 = scmp.ne.s32.totalorder %s77, %s93
      %p95 = scmp.eq.s32.totalorder %s29, 0
      %p96 = por %p94, %p95
      %s97 = ssub.s32 %s30, %s42
      %p98 = scmp.eq.s32.totalorder %s97, 0
      %s100 = sadd.s32 %s99, 1
      %s101 = scalar_select %p98, %s99, %s100
      %p104 = pneg %p98
      %p105 = scmp.eq.s32.totalorder %s23, 1
      %p106 = por %p104, %p105
      %p107 = scmp.ne.s32.totalorder %s99, %s102
      %p108 = scmp.eq.s32.totalorder %s23, 0
      %p109 = por %p107, %p108
      %p110 = scmp.ne.s32.totalorder %s99, %s102
      %p111 = scmp.eq.s32.totalorder %s28, 1
      %p112 = por %p110, %p111
      %p113 = scmp.ne.s32.totalorder %s102, %s103
      %p114 = scmp.eq.s32.totalorder %s28, 0
      %p115 = por %p113, %p114
      %p116 = scmp.ne.s32.totalorder %s102, %s103
      %p117 = scmp.eq.s32.totalorder %s29, 1
      %p118 = por %p116, %p117
      %p120 = scmp.ne.s32.totalorder %s103, %s119
      %p121 = scmp.eq.s32.totalorder %s29, 0
      %p122 = por %p120, %p121
      %s123 = ssub.s32 %s30, %s42
      %s124 = ssub.s32 %s31, %s38
      %s125 = sor.u32 %s123, %s124
      %p126 = scmp.eq.s32.totalorder %s125, 0
      %s128 = sadd.s32 %s127, 1
      %s129 = scalar_select %p126, %s127, %s128
      %p132 = pneg %p126
      %p133 = scmp.eq.s32.totalorder %s23, 1
      %p134 = por %p132, %p133
      %p135 = scmp.ne.s32.totalorder %s127, %s130
      %p136 = scmp.eq.s32.totalorder %s23, 0
      %p137 = por %p135, %p136
      %p138 = scmp.ne.s32.totalorder %s127, %s130
      %p139 = scmp.eq.s32.totalorder %s28, 1
      %p140 = por %p138, %p139
      %p141 = scmp.ne.s32.totalorder %s130, %s131
      %p142 = scmp.eq.s32.totalorder %s28, 0
      %p143 = por %p141, %p142
      %p144 = scmp.ne.s32.totalorder %s130, %s131
      %p145 = scmp.eq.s32.totalorder %s29, 1
      %p146 = por %p144, %p145
      %p148 = scmp.ne.s32.totalorder %s131, %s147
      %p149 = scmp.eq.s32.totalorder %s29, 0
      %p150 = por %p148, %p149
      %s151 = ssub.s32 %s30, %s42
      %s152 = ssub.s32 %s31, %s38
      %s153 = sor.u32 %s151, %s152
      %p154 = scmp.eq.s32.totalorder %s153, 0
      %s156 = sadd.s32 %s155, 1
      %s157 = scalar_select %p154, %s155, %s156
      %p160 = pneg %p154
      %p161 = scmp.eq.s32.totalorder %s23, 1
      %p162 = por %p160, %p161
      %p163 = scmp.ne.s32.totalorder %s155, %s158
      %p164 = scmp.eq.s32.totalorder %s23, 0
      %p165 = por %p163, %p164
      %p166 = scmp.ne.s32.totalorder %s155, %s158
      %p167 = scmp.eq.s32.totalorder %s28, 1
      %p168 = por %p166, %p167
      %p169 = scmp.ne.s32.totalorder %s158, %s159
      %p170 = scmp.eq.s32.totalorder %s28, 0
      %p171 = por %p169, %p170
      %p172 = scmp.ne.s32.totalorder %s158, %s159
      %p173 = scmp.eq.s32.totalorder %s29, 1
      %p174 = por %p172, %p173
      %p176 = scmp.ne.s32.totalorder %s159, %s175
      %p177 = scmp.eq.s32.totalorder %s29, 0
      %p178 = por %p176, %p177
      %p179 = scmp.le.s32.totalorder 1, %s23
      %p180 = scmp.lt.s32.totalorder %s23, 3
      %p181 = pnand %p179, %p180
      %p182 = pneg %p181
      // Predicated region
      $region9: #{tpu_custom_call.1} parent=5 // pred_check
        _
      $region10: #{tpu_custom_call.1} parent=5 // pred_check_branch
        %184 = sbr.rel (%p181) target = $region12
      $region11: #{tpu_custom_call.1} parent=5 // pred_region
        %s185 = ssub.s32 %s23, 1
      $region12: #{tpu_custom_call.1} parent=5 // pred_fallthru
        _
      %p186 = scmp.lt.s32.totalorder %s23, 2
      // Predicated region
      $region13: #{tpu_custom_call.1} parent=5 // pred_check
        %p187 = pneg %p186
      $region14: #{tpu_custom_call.1} parent=5 // pred_check_branch
        %189 = sbr.rel (%p187) target = $region16
      $region15: #{tpu_custom_call.1} parent=5 // pred_region
        // Predicated region
        $region17: #{tpu_custom_call.1} parent=15 // pred_check
          %p190 = pneg %p57
        $region18: #{tpu_custom_call.1} parent=15 // pred_check_branch
          %192 = sbr.rel (%p190) target = $region20
        $region19: #{tpu_custom_call.1} parent=15 // pred_region
          %s193 = sand.u32 %s47, 1
          %s194 = scalar_lea.sflag [#allocation3], %s193
          %s195 = sand.u32 %s47, 1
          %s196 = smul.addr %s195, 8
          %s197 = scalar_lea.vmem [#allocation2], %s196
          %s199 = ssub.s32 128, 128
          %200 = vsyncadd %s194, %s199
          %s201 = sadd.s32 %s31, %s30
          %s202 = smul.addr %s201, 128
          %s203 = scalar_lea.hbm %s0, %s202
          %s205 = sshll.u32 %s197, 4
          %s206 = int_to_ptr.vmem [resolvable:$true] %s205
          %208 = dma.hbm_to_vmem [thread:$0]  %s203, 128, %s206, %s194
        $region20: #{tpu_custom_call.1} parent=15 // pred_fallthru
          _
        // Predicated region
        $region21: #{tpu_custom_call.1} parent=15 // pred_check
          %p209 = pneg %p83
        $region22: #{tpu_custom_call.1} parent=15 // pred_check_branch
          %211 = sbr.rel (%p209) target = $region24
        $region23: #{tpu_custom_call.1} parent=15 // pred_region
          %s212 = sand.u32 %s23, 1
          %s213 = scalar_lea.sflag [#allocation6], %s212
          %s214 = sand.u32 %s73, 1
          %s215 = smul.addr %s214, 8
          %s216 = scalar_lea.vmem [#allocation5], %s215
          %s218 = ssub.s32 128, 128
          %219 = vsyncadd %s213, %s218
          %s220 = smul.addr %s30, 128
          %s221 = scalar_lea.hbm %s1, %s220
          %s223 = sshll.u32 %s216, 4
          %s224 = int_to_ptr.vmem [resolvable:$true] %s223
          %226 = dma.hbm_to_vmem [thread:$0]  %s221, 128, %s224, %s213
        $region24: #{tpu_custom_call.1} parent=15 // pred_fallthru
          _
        // Predicated region
        $region25: #{tpu_custom_call.1} parent=15 // pred_check
          %p227 = pneg %p109
        $region26: #{tpu_custom_call.1} parent=15 // pred_check_branch
          %229 = sbr.rel (%p227) target = $region28
        $region27: #{tpu_custom_call.1} parent=15 // pred_region
          %s230 = sand.u32 %s23, 1
          %s231 = scalar_lea.sflag [#allocation6], %s230
          %s232 = sand.u32 %s99, 1
          %s233 = smul.addr %s232, 8
          %s234 = scalar_lea.vmem [#allocation7], %s233
          %s236 = ssub.s32 128, 128
          %237 = vsyncadd %s231, %s236
          %s238 = smul.addr %s30, 128
          %s239 = scalar_lea.hbm %s2, %s238
          %s241 = sshll.u32 %s234, 4
          %s242 = int_to_ptr.vmem [resolvable:$true] %s241
          %244 = dma.hbm_to_vmem [thread:$0]  %s239, 128, %s242, %s231
        $region28: #{tpu_custom_call.1} parent=15 // pred_fallthru
          _
      $region16: #{tpu_custom_call.1} parent=5 // pred_fallthru
        _
      %p245 = scmp.le.s32.totalorder 1, %s23
      %p246 = scmp.lt.s32.totalorder %s23, 3
      %p247 = pnand %p245, %p246
      %p248 = pneg %p247
      // Predicated region
      $region29: #{tpu_custom_call.1} parent=5 // pred_check
        _
      $region30: #{tpu_custom_call.1} parent=5 // pred_check_branch
        %250 = sbr.rel (%p247) target = $region32
      $region31: #{tpu_custom_call.1} parent=5 // pred_region
        %s251 = ssub.s32 %s23, 1
        %s252 = sand.u32 %s50, 1
        %s253 = scalar_lea.sflag [#allocation3], %s252
        %s254 = sand.u32 %s50, 1
        %s255 = smul.addr %s254, 8
        %s256 = scalar_lea.vmem [#allocation2], %s255
        // Predicated region
        $region33: #{tpu_custom_call.1} parent=31 // pred_check
          %p257 = pneg %p63
        $region34: #{tpu_custom_call.1} parent=31 // pred_check_branch
          %259 = sbr.rel (%p257) target = $region36
        $region35: #{tpu_custom_call.1} parent=31 // pred_region
          %260 = dma.done %s253, 128
        $region36: #{tpu_custom_call.1} parent=31 // pred_fallthru
          _
        %s261 = sand.u32 %s28, 1
        %s262 = scalar_lea.sflag [#allocation6], %s261
        %s263 = sand.u32 %s76, 1
        %s264 = smul.addr %s263, 8
        %s265 = scalar_lea.vmem [#allocation5], %s264
        // Predicated region
        $region37: #{tpu_custom_call.1} parent=31 // pred_check
          %p266 = pneg %p89
        $region38: #{tpu_custom_call.1} parent=31 // pred_check_branch
          %268 = sbr.rel (%p266) target = $region40
        $region39: #{tpu_custom_call.1} parent=31 // pred_region
          %269 = dma.done %s262, 128
        $region40: #{tpu_custom_call.1} parent=31 // pred_fallthru
          _
        %s270 = sand.u32 %s28, 1
        %s271 = scalar_lea.sflag [#allocation6], %s270
        %s272 = sand.u32 %s102, 1
        %s273 = smul.addr %s272, 8
        %s274 = scalar_lea.vmem [#allocation7], %s273
        // Predicated region
        $region41: #{tpu_custom_call.1} parent=31 // pred_check
          %p275 = pneg %p115
        $region42: #{tpu_custom_call.1} parent=31 // pred_check_branch
          %277 = sbr.rel (%p275) target = $region44
        $region43: #{tpu_custom_call.1} parent=31 // pred_region
          %278 = dma.done %s271, 128
        $region44: #{tpu_custom_call.1} parent=31 // pred_fallthru
          _
        %s279 = sand.u32 %s50, 1
        %s280 = scalar_lea.sflag [#allocation3], %s279
        %s281 = sand.u32 %s50, 1
        %s282 = smul.addr %s281, 8
        %s283 = scalar_lea.vmem [#allocation2], %s282
        %p284 = pneg %p63
        %p285 = pneg %p60
        %s286 = sand.u32 %s28, 1
        %s287 = scalar_lea.sflag [#allocation6], %s286
        %s288 = sand.u32 %s76, 1
        %s289 = smul.addr %s288, 8
        %s290 = scalar_lea.vmem [#allocation5], %s289
        %p291 = pneg %p89
        %p292 = pneg %p86
        %s293 = sand.u32 %s28, 1
        %s294 = scalar_lea.sflag [#allocation6], %s293
        %s295 = sand.u32 %s102, 1
        %s296 = smul.addr %s295, 8
        %s297 = scalar_lea.vmem [#allocation7], %s296
        %p298 = pneg %p115
        %p299 = pneg %p112
        %p300 = pneg %p143
        %p301 = pneg %p140
        %s302 = sand.u32 %s130, 1
        %s303 = scalar_lea.sflag [#allocation4], %s302
        %s304 = sand.u32 %s130, 1
        %s305 = smul.addr %s304, 8
        %s306 = scalar_lea.vmem [#allocation8], %s305
        %p307 = pneg %p171
        %p308 = pneg %p168
        %s309 = sand.u32 %s158, 1
        %s310 = scalar_lea.sflag [#allocation10], %s309
        %s311 = sand.u32 %s158, 1
        %s312 = smul.addr %s311, 8
        %s313 = scalar_lea.vmem [#allocation9], %s312
        %v314 = vld [vmem:[%s256] sm:$0xff]
        %v315 = vld [vmem:[%s265] sm:$0xff]
        %v316 = vld [vmem:[%s274] sm:$0xff]
        %v317 = vmul.f32 %v314, 0.17677669
        %vm318 = vcmask 261120
        %v320 = vsel %vm318, %v317, 0
        %v323 = vsel %vm318, %v315, 0
        %325 = vmatprep.subr.mxu0 0.0
        %326 = vmatpush1.xpose.msra.mxu0 0.0
        %327 = vmatprep.subr.mxu0 0.0
        %328 = vmatpush1.xpose.msra.mxu0 0.0
        %329 = vmatprep.subr.mxu0 0.0
        %330 = vmatpush1.xpose.msra.mxu0 0.0
        %331 = vmatprep.subr.mxu0 0.0
        %332 = vmatpush1.xpose.msra.mxu0 0.0
        %333 = vmatprep.subr.mxu0 0.0
        %334 = vmatpush1.xpose.msra.mxu0 0.0
        %335 = vmatprep.subr.mxu0 0.0
        %336 = vmatpush1.xpose.msra.mxu0 0.0
        %337 = vmatprep.subr.mxu0 0.0
        %338 = vmatpush1.xpose.msra.mxu0 0.0
        %339 = vmatprep.subr.mxu0 0.0
        %340 = vmatpush1.xpose.msra.mxu0 0.0
        %341 = vmatprep.subr.mxu0 0.0
        %342 = vmatpush1.xpose.msra.mxu0 0.0
        %343 = vmatprep.subr.mxu0 0.0
        %344 = vmatpush1.xpose.msra.mxu0 0.0
        %345 = vmatprep.subr.mxu0 0.0
        %346 = vmatpush1.xpose.msra.mxu0 0.0
        %347 = vmatprep.subr.mxu0 0.0
        %348 = vmatpush1.xpose.msra.mxu0 0.0
        %349 = vmatprep.subr.mxu0 0.0
        %350 = vmatpush1.xpose.msra.mxu0 0.0
        %351 = vmatprep.subr.mxu0 0.0
        %352 = vmatpush1.xpose.msra.mxu0 0.0
        %353 = vmatprep.subr.mxu0 0.0
        %354 = vmatpush1.xpose.msra.mxu0 0.0
        %355 = vmatprep.subr.mxu0 0.0
        %356 = vmatpush1.xpose.msra.mxu0 %v323
        %357 = vmatprep.subr.mxu0 0.0
        %358 = vmatpush2.xpose.msra.mxu0 0.0
        %359 = vmatprep.subr.mxu0 0.0
        %360 = vmatpush2.xpose.msra.mxu0 0.0
        %361 = vmatprep.subr.mxu0 0.0
        %362 = vmatpush2.xpose.msra.mxu0 0.0
        %363 = vmatprep.subr.mxu0 0.0
        %364 = vmatpush2.xpose.msra.mxu0 0.0
        %365 = vmatprep.subr.mxu0 0.0
        %366 = vmatpush2.xpose.msra.mxu0 0.0
        %367 = vmatprep.subr.mxu0 0.0
        %368 = vmatpush2.xpose.msra.mxu0 0.0
        %369 = vmatprep.subr.mxu0 0.0
        %370 = vmatpush2.xpose.msra.mxu0 0.0
        %371 = vmatprep.subr.mxu0 0.0
        %372 = vmatpush2.xpose.msra.mxu0 0.0
        %373 = vmatprep.subr.mxu0 0.0
        %374 = vmatpush2.xpose.msra.mxu0 0.0
        %375 = vmatprep.subr.mxu0 0.0
        %376 = vmatpush2.xpose.msra.mxu0 0.0
        %377 = vmatprep.subr.mxu0 0.0
        %378 = vmatpush2.xpose.msra.mxu0 0.0
        %379 = vmatprep.subr.mxu0 0.0
        %380 = vmatpush2.xpose.msra.mxu0 0.0
        %381 = vmatprep.subr.mxu0 0.0
        %382 = vmatpush2.xpose.msra.mxu0 0.0
        %383 = vmatprep.subr.mxu0 0.0
        %384 = vmatpush2.xpose.msra.mxu0 0.0
        %385 = vmatprep.subr.mxu0 0.0
        %386 = vmatpush2.xpose.msra.mxu0 0.0
        %387 = vmatprep.subr.mxu0 0.0
        %388 = vmatpush2.xpose.msra.mxu0 0.0
        %389 = vmatprep.mubr.f32.mxu0 0.0
        %390 = vmatmul.mubr.f32.gmra.mxu0 %v320
        %v391 = vpop.f32.mrf.mxu0
        %v392 = vadd.f32 0.0, %v391
        %v393 = vpop.f32.mrf.mxu0
        %394 = vdwg.mxu0
        %vm395 = vcmask 64512
        %v396 = vsel %vm395, %v392, -inf
        %397 = vmax.xlane.f32.xlu0 %v396
        %v398 = vpop.xlane.xlu0 %397
        %v399 = vsub.f32 %v392, %v398
        %v400 = vmul.f32 %v399, 1.442695
        %v401 = vpow.pop %v400
        %v402 = vsel %vm395, %v401, 0.0
        %403 = vadd.xlane.f32.xlu0 %v402
        %v404 = vpop.xlane.xlu0 %403
        %v405 = vrcp.pop %v404
        %v407 = vsel %vm395, %v401, 0
        %409 = vmatprep.subr.mxu0 0.0
        %410 = vmatpush1.msra.mxu0 0.0
        %411 = vmatprep.subr.mxu0 0.0
        %412 = vmatpush1.msra.mxu0 0.0
        %413 = vmatprep.subr.mxu0 0.0
        %414 = vmatpush1.msra.mxu0 0.0
        %415 = vmatprep.subr.mxu0 0.0
        %416 = vmatpush1.msra.mxu0 0.0
        %417 = vmatprep.subr.mxu0 0.0
        %418 = vmatpush1.msra.mxu0 0.0
        %419 = vmatprep.subr.mxu0 0.0
        %420 = vmatpush1.msra.mxu0 0.0
        %421 = vmatprep.subr.mxu0 0.0
        %422 = vmatpush1.msra.mxu0 0.0
        %423 = vmatprep.subr.mxu0 0.0
        %424 = vmatpush1.msra.mxu0 0.0
        %425 = vmatprep.subr.mxu0 0.0
        %426 = vmatpush1.msra.mxu0 0.0
        %427 = vmatprep.subr.mxu0 0.0
        %428 = vmatpush1.msra.mxu0 0.0
        %429 = vmatprep.subr.mxu0 0.0
        %430 = vmatpush1.msra.mxu0 0.0
        %431 = vmatprep.subr.mxu0 0.0
        %432 = vmatpush1.msra.mxu0 0.0
        %433 = vmatprep.subr.mxu0 0.0
        %434 = vmatpush1.msra.mxu0 0.0
        %435 = vmatprep.subr.mxu0 0.0
        %436 = vmatpush1.msra.mxu0 0.0
        %437 = vmatprep.subr.mxu0 0.0
        %438 = vmatpush1.msra.mxu0 0.0
        %439 = vmatprep.subr.mxu0 0.0
        %440 = vmatpush1.msra.mxu0 %v316
        %441 = vmatprep.subr.mxu0 0.0
        %442 = vmatpush2.msra.mxu0 0.0
        %443 = vmatprep.subr.mxu0 0.0
        %444 = vmatpush2.msra.mxu0 0.0
        %445 = vmatprep.subr.mxu0 0.0
        %446 = vmatpush2.msra.mxu0 0.0
        %447 = vmatprep.subr.mxu0 0.0
        %448 = vmatpush2.msra.mxu0 0.0
        %449 = vmatprep.subr.mxu0 0.0
        %450 = vmatpush2.msra.mxu0 0.0
        %451 = vmatprep.subr.mxu0 0.0
        %452 = vmatpush2.msra.mxu0 0.0
        %453 = vmatprep.subr.mxu0 0.0
        %454 = vmatpush2.msra.mxu0 0.0
        %455 = vmatprep.subr.mxu0 0.0
        %456 = vmatpush2.msra.mxu0 0.0
        %457 = vmatprep.subr.mxu0 0.0
        %458 = vmatpush2.msra.mxu0 0.0
        %459 = vmatprep.subr.mxu0 0.0
        %460 = vmatpush2.msra.mxu0 0.0
        %461 = vmatprep.subr.mxu0 0.0
        %462 = vmatpush2.msra.mxu0 0.0
        %463 = vmatprep.subr.mxu0 0.0
        %464 = vmatpush2.msra.mxu0 0.0
        %465 = vmatprep.subr.mxu0 0.0
        %466 = vmatpush2.msra.mxu0 0.0
        %467 = vmatprep.subr.mxu0 0.0
        %468 = vmatpush2.msra.mxu0 0.0
        %469 = vmatprep.subr.mxu0 0.0
        %470 = vmatpush2.msra.mxu0 0.0
        %471 = vmatprep.subr.mxu0 0.0
        %472 = vmatpush2.msra.mxu0 0.0
        %473 = vmatprep.mubr.f32.mxu0 0.0
        %474 = vmatmul.mubr.f32.gmra.mxu0 %v407
        %v475 = vpop.f32.mrf.mxu0
        %v476 = vadd.f32 0.0, %v475
        %v477 = vpop.f32.mrf.mxu0
        %478 = vdwg.mxu0
        %v479 = vmul.f32 %v401, %v405
        %480 = vst.msk [vmem:[%s313] sm:$0xff] %vm395, %v479
        %v481 = vmul.f32 %v476, %v405
        %482 = vst.msk [vmem:[%s306] sm:$0xff] %vm318, %v481
        %s483 = sand.u32 %s130, 1
        %s484 = scalar_lea.sflag [#allocation4], %s483
        %s485 = sand.u32 %s130, 1
        %s486 = smul.addr %s485, 8
        %s487 = scalar_lea.vmem [#allocation8], %s486
        %s488 = sand.u32 %s158, 1
        %s489 = scalar_lea.sflag [#allocation10], %s488
        %s490 = sand.u32 %s158, 1
        %s491 = smul.addr %s490, 8
        %s492 = scalar_lea.vmem [#allocation9], %s491
        // Predicated region
        $region45: #{tpu_custom_call.1} parent=31 // pred_check
          %p493 = pneg %p140
        $region46: #{tpu_custom_call.1} parent=31 // pred_check_branch
          %495 = sbr.rel (%p493) target = $region48
        $region47: #{tpu_custom_call.1} parent=31 // pred_region
          %s497 = ssub.s32 128, 128
          %498 = vsyncadd %s484, %s497
          %s499 = sadd.s32 %s33, %s32
          %s500 = smul.addr %s499, 128
          %s501 = scalar_lea.hbm %s3, %s500
          %s503 = sshll.u32 %s487, 4
          %s504 = int_to_ptr.vmem [resolvable:$true] %s503
          %506 = dma.vmem_to_hbm [thread:$0]  %s504, 128, %s501, %s484
        $region48: #{tpu_custom_call.1} parent=31 // pred_fallthru
          _
        // Predicated region
        $region49: #{tpu_custom_call.1} parent=31 // pred_check
          %p507 = pneg %p168
        $region50: #{tpu_custom_call.1} parent=31 // pred_check_branch
          %509 = sbr.rel (%p507) target = $region52
        $region51: #{tpu_custom_call.1} parent=31 // pred_region
          %s511 = ssub.s32 128, 128
          %512 = vsyncadd %s489, %s511
          %s513 = sadd.s32 %s33, %s32
          %s514 = smul.addr %s513, 128
          %s515 = scalar_lea.hbm %s4, %s514
          %s517 = sshll.u32 %s492, 4
          %s518 = int_to_ptr.vmem [resolvable:$true] %s517
          %520 = dma.vmem_to_hbm [thread:$0]  %s518, 128, %s515, %s489
        $region52: #{tpu_custom_call.1} parent=31 // pred_fallthru
          _
      $region32: #{tpu_custom_call.1} parent=5 // pred_fallthru
        _
      %p521 = scmp.le.s32.totalorder 2, %s23
      // Predicated region
      $region53: #{tpu_custom_call.1} parent=5 // pred_check
        %p522 = pneg %p521
      $region54: #{tpu_custom_call.1} parent=5 // pred_check_branch
        %524 = sbr.rel (%p522) target = $region56
      $region55: #{tpu_custom_call.1} parent=5 // pred_region
        %s525 = ssub.s32 %s23, 2
        // Predicated region
        $region57: #{tpu_custom_call.1} parent=55 // pred_check
          %p526 = pneg %p146
        $region58: #{tpu_custom_call.1} parent=55 // pred_check_branch
          %528 = sbr.rel (%p526) target = $region60
        $region59: #{tpu_custom_call.1} parent=55 // pred_region
          %s529 = sand.u32 %s131, 1
          %s530 = scalar_lea.sflag [#allocation4], %s529
          %s531 = sand.u32 %s131, 1
          %s532 = smul.addr %s531, 8
          %s533 = scalar_lea.vmem [#allocation8], %s532
          %534 = dma.done %s530, 128
        $region60: #{tpu_custom_call.1} parent=55 // pred_fallthru
          _
        // Predicated region
        $region61: #{tpu_custom_call.1} parent=55 // pred_check
          %p535 = pneg %p174
        $region62: #{tpu_custom_call.1} parent=55 // pred_check_branch
          %537 = sbr.rel (%p535) target = $region64
        $region63: #{tpu_custom_call.1} parent=55 // pred_region
          %s538 = sand.u32 %s159, 1
          %s539 = scalar_lea.sflag [#allocation10], %s538
          %s540 = sand.u32 %s159, 1
          %s541 = smul.addr %s540, 8
          %s542 = scalar_lea.vmem [#allocation9], %s541
          %543 = dma.done %s539, 128
        $region64: #{tpu_custom_call.1} parent=55 // pred_fallthru
          _
      $region56: #{tpu_custom_call.1} parent=5 // pred_fallthru
        _
    $region6: #{tpu_custom_call.1} parent=1 // loop_footer
      %s27 = sadd.s32 1, %s23
    $region7: #{tpu_custom_call.1} parent=1 // loop_footer_branch
      %22 = sbr.rel target = $region3
    $region8: #{tpu_custom_call.1} parent=1 // loop_exit
      _
    %544 = vsyncpa [#allocation3], 1
    %s545 = scalar_lea.sflag [#allocation3], 1
    %546 = vsyncpa %s545, 1
    %547 = vsyncpa [#allocation6], 1
    %s548 = scalar_lea.sflag [#allocation6], 1
    %549 = vsyncpa %s548, 1
    %550 = vsyncpa [#allocation4], 1
    %s551 = scalar_lea.sflag [#allocation4], 1
    %552 = vsyncpa %s551, 1
    %553 = vsyncpa [#allocation10], 1
    %s554 = scalar_lea.sflag [#allocation10], 1
    %555 = vsyncpa %s554, 1

</llo_original>
